<compile_context>
chip_gen: v7x
topology: tpu7x:2x2x1
jax: 0.10.0
libtpu: 0.0.40
codegen_flags: <defaults>
</compile_context>

<pallas_src>
import functools

import numpy as np
import jax
import jax.numpy as jnp
from jax.experimental import pallas as pl
from jax.experimental.pallas import tpu as pltpu


# Flip to jnp.bfloat16 to feed the MXU native bf16 operands (f32 accumulate) on
# v6e/v7x at larger sizes; kept f32 here so the self-test matches the XLA f32
# reference tightly (at these tiny sizes the kernel is overhead-bound anyway).
_MATMUL_DTYPE = jnp.float32


def _adjust_fused_kernel(maskA_ref, maskB_ref, pos_ref, neg_ref,
                         w0_ref, b0_ref, w1_ref, b1_ref, w2_ref, b2_ref,
                         o_ref, *, W, L):
    """Fused Adjust forward for one batch tile (channel-major, flat batch*spatial).

    maskA_ref : (9*2C, L) f32   border masks broadcast over Cin=2C (conv1/conv2)
    maskB_ref : (9*C,  L) f32   border masks broadcast over Cin=C  (conv3)
    pos_ref   : (C, L)          first C input channels   (L = n_tile*H*W lanes)
    neg_ref   : (C, L)          last  C input channels
    w0_ref    : (2C, 9*2C)      packed weight, column = tap*Cin + cin
    w1_ref    : (C,  9*2C)
    w2_ref    : (C,  9*C)
    b*_ref    : (Cout, 1)
    o_ref     : (C, L)
    """
    maskA = maskA_ref[...]                  # hoisted: loaded once, reused
    maskB = maskB_ref[...]

    def stacked_taps(x):
        # x: (cin, L) -> (9*cin, L); rows k*cin..k*cin+cin-1 = tap k of all
        # channels.  Tap k at flat output j reads x[:, j + (dy-1)*W + (dx-1)];
        # wrapped / cross-image reads are killed by the mask multiply below.
        rows = []
        for k in range(9):
            dy, dx = divmod(k, 3)
            off = (dy - 1) * W + (dx - 1)
            rows.append(x if off == 0 else
                        pltpu.roll(x, shift=(-off) % L, axis=1))
        return jnp.concatenate(rows, axis=0)

    def conv(x, mask, w_ref, b_ref, relu):
        taps = stacked_taps(x) * mask       # mask BEFORE the matmul (padding)
        y = jnp.dot(w_ref[...].astype(_MATMUL_DTYPE),
                    taps.astype(_MATMUL_DTYPE),
                    preferred_element_type=jnp.float32) + b_ref[...]
        return jnp.maximum(y, 0.0) if relu else y

    # Channel concat of [pos, neg] folded into one sublane stack (fills 8 sublanes).
    x0 = jnp.concatenate([pos_ref[...], neg_ref[...]], axis=0).astype(jnp.float32)

    a1 = conv(x0, maskA, w0_ref, b0_ref, relu=True)    # (2C, L)  K = 9*2C
    a2 = conv(a1, maskA, w1_ref, b1_ref, relu=True)    # (C,  L)  K = 9*2C
    a3 = conv(a2, maskB, w2_ref, b2_ref, relu=False)   # (C,  L)  K = 9*C

    o_ref[...] = a3.astype(o_ref.dtype)


def _border_masks(H, W):
    """(9, H*W) 0/1 masks: masks[k, h*W+w]==1 iff (h+dy-1, w+dx-1) is in-image."""
    m = np.zeros((9, H, W), np.float32)
    for k in range(9):
        dy, dx = divmod(k, 3)
        ky, kx = dy - 1, dx - 1
        m[k, max(0, -ky):min(H, H - ky), max(0, -kx):min(W, W - kx)] = 1.0
    return m.reshape(9, H * W)


def _mask_slab(H, W, cin, n_tile):
    """(9*cin, n_tile*H*W): row k*cin+c = per-image mask of tap k, tiled over images."""
    base = _border_masks(H, W)                     # (9, HW)
    tiled = np.tile(base, (1, n_tile))             # (9, n_tile*HW)
    return np.repeat(tiled, cin, axis=0).astype(np.float32)


def _pack_weight(w):
    """HWIO (3,3,Cin,Cout) -> lane-dense packed (Cout, 9*Cin), col = tap*Cin + cin."""
    kh, kw, cin, cout = w.shape
    return (jnp.transpose(w.reshape(kh * kw, cin, cout), (2, 0, 1))
            .reshape(cout, kh * kw * cin).astype(jnp.float32))


def _num_tensorcores_per_chip():
    # Only v7x has 2 TensorCores per chip; fall back to 1 on any doubt.
    try:
        kind = jax.devices()[0].device_kind.lower()
        if "v7" in kind:
            return 2
    except Exception:
        pass
    return 1


def adjust_forward(pos_nchw, neg_nchw, params):
    """Matches Adjust.forward: NCHW in, NCHW out.  Single fused Pallas kernel."""
    N, C, H, W = pos_nchw.shape
    HW = H * W
    L = N * HW
    (w0, b0), (w1, b1), (w2, b2) = params

    # Grid: 2-way batch split only when 2 TCs are available (v7x) and it tiles
    # cleanly into lane-aligned blocks; otherwise a single step (v5e/v6e).
    G = 1
    if _num_tensorcores_per_chip() >= 2 and N % 2 == 0 and (N // 2) * HW % 128 == 0:
        G = 2
    n_tile = N // G
    L_tile = n_tile * HW

    # Packed, lane-dense constant operands.
    w0p = _pack_weight(w0)                              # (2C, 9*2C)
    w1p = _pack_weight(w1)                              # (C,  9*2C)
    w2p = _pack_weight(w2)                              # (C,  9*C)
    b0c = b0.reshape(2 * C, 1).astype(jnp.float32)
    b1c = b1.reshape(C, 1).astype(jnp.float32)
    b2c = b2.reshape(C, 1).astype(jnp.float32)
    maskA = jnp.asarray(_mask_slab(H, W, 2 * C, n_tile))  # (9*2C, L_tile)
    maskB = jnp.asarray(_mask_slab(H, W, C, n_tile))      # (9*C,  L_tile)

    # (N,C,H,W) -> (C, N*HW): tiny wrapper-side transpose (few KB) that puts
    # batch*spatial on the lane axis.
    def to_cl(x):
        return jnp.transpose(x.reshape(N, C, HW), (1, 0, 2)).reshape(C, L)

    pos_cl = to_cl(pos_nchw)
    neg_cl = to_cl(neg_nchw)

    kernel = functools.partial(_adjust_fused_kernel, W=W, L=L_tile)
    out_cl = pl.pallas_call(
        kernel,
        out_shape=jax.ShapeDtypeStruct((C, L), jnp.float32),
        grid=(G,),
        in_specs=[
            pl.BlockSpec((9 * 2 * C, L_tile), lambda g: (0, 0)),   # maskA
            pl.BlockSpec((9 * C, L_tile), lambda g: (0, 0)),       # maskB
            pl.BlockSpec((C, L_tile), lambda g: (0, g)),           # pos
            pl.BlockSpec((C, L_tile), lambda g: (0, g)),           # neg
            pl.BlockSpec((2 * C, 9 * 2 * C), lambda g: (0, 0)),    # w0 packed
            pl.BlockSpec((2 * C, 1), lambda g: (0, 0)),            # b0
            pl.BlockSpec((C, 9 * 2 * C), lambda g: (0, 0)),        # w1 packed
            pl.BlockSpec((C, 1), lambda g: (0, 0)),                # b1
            pl.BlockSpec((C, 9 * C), lambda g: (0, 0)),            # w2 packed
            pl.BlockSpec((C, 1), lambda g: (0, 0)),                # b2
        ],
        out_specs=pl.BlockSpec((C, L_tile), lambda g: (0, g)),
        compiler_params=pltpu.CompilerParams(
            dimension_semantics=("parallel",)),
    )(maskA, maskB, pos_cl, neg_cl, w0p, b0c, w1p, b1c, w2p, b2c)

    # (C, N*HW) -> (N, C, H, W)
    return jnp.transpose(out_cl.reshape(C, N, HW), (1, 0, 2)).reshape(N, C, H, W)


def init_adjust_params(key, counting_features):
    """Deterministic parameter init matching the nn.Sequential shapes.
    Weights stored as HWIO (3,3,Cin,Cout); PyTorch's (Cout,Cin,3,3) is just a
    transpose of this."""
    C = counting_features
    shapes = [
        ((3, 3, 2 * C, 2 * C), (2 * C,)),   # Conv2d(2C, 2C, 3, p=1)
        ((3, 3, 2 * C, C), (C,)),           # Conv2d(2C,  C, 3, p=1)
        ((3, 3, C, C), (C,)),               # Conv2d( C,  C, 3, p=1)
    ]
    params = []
    for i, (ws, bs) in enumerate(shapes):
        kw, kb = jax.random.split(jax.random.fold_in(key, i))
        fan_in = ws[0] * ws[1] * ws[2]
        scale = 1.0 / jnp.sqrt(fan_in)
        w = jax.random.uniform(kw, ws, jnp.float32, -scale, scale)
        b = jax.random.uniform(kb, bs, jnp.float32, -scale, scale)
        params.append((w, b))
    return params


# ---------------- pure-JAX reference ----------------
def adjust_forward_ref(pos_nchw, neg_nchw, params):
    t = jnp.concatenate([pos_nchw, neg_nchw], axis=1)
    (w0, b0), (w1, b1), (w2, b2) = params

    def conv(x, w, b, relu):
        y = jax.lax.conv_general_dilated(
            x, w, window_strides=(1, 1), padding="SAME",
            dimension_numbers=("NCHW", "HWIO", "NCHW"))
        y = y + b[None, :, None, None]
        return jnp.maximum(y, 0.0) if relu else y

    x = conv(t, w0, b0, True)
    x = conv(x, w1, b1, True)
    x = conv(x, w2, b2, False)
    return x


if __name__ == "__main__":
    key = jax.random.PRNGKey(0)
    counting_features = 4
    N, H, W = 2, 16, 16

    k_pos, k_neg, k_par = jax.random.split(key, 3)
    pos = jax.random.normal(k_pos, (N, counting_features, H, W), jnp.float32)
    neg = jax.random.normal(k_neg, (N, counting_features, H, W), jnp.float32)
    params = init_adjust_params(k_par, counting_features)

    out = jax.block_until_ready(adjust_forward(pos, neg, params))
    ref = jax.block_until_ready(adjust_forward_ref(pos, neg, params))

    assert out.shape == (N, counting_features, H, W)
    assert jnp.allclose(out, ref, atol=1e-3, rtol=1e-3), "mismatch vs reference"

    print("KERNEL_OK")
</pallas_src>

<mosaic_0001>
module attributes {stable_mosaic.version = 11 : i64} {
  func.func @_adjust_fused_kernel(%arg0: i32, %arg1: memref<72x512xf32, #tpu.memory_space<vmem>>, %arg2: memref<36x512xf32, #tpu.memory_space<vmem>>, %arg3: memref<4x512xf32, #tpu.memory_space<vmem>>, %arg4: memref<4x512xf32, #tpu.memory_space<vmem>>, %arg5: memref<8x72xf32, #tpu.memory_space<vmem>>, %arg6: memref<8x1xf32, #tpu.memory_space<vmem>>, %arg7: memref<4x72xf32, #tpu.memory_space<vmem>>, %arg8: memref<4x1xf32, #tpu.memory_space<vmem>>, %arg9: memref<4x36xf32, #tpu.memory_space<vmem>>, %arg10: memref<4x1xf32, #tpu.memory_space<vmem>>, %arg11: memref<4x512xf32, #tpu.memory_space<vmem>>) attributes {dimension_semantics = [#tpu.dimension_semantics<parallel>], iteration_bounds = array<i64: 1>, scalar_prefetch = 0 : i64, scratch_operands = 0 : i64, tpu.core_type = #tpu.core_type<tc>, window_params = [{pipeline_mode = #tpu.pipeline_mode<synchronous>, transform_indices = @transform_0, window_bounds = array<i64: 72, 512>}, {pipeline_mode = #tpu.pipeline_mode<synchronous>, transform_indices = @transform_1, window_bounds = array<i64: 36, 512>}, {transform_indices = @transform_2, window_bounds = array<i64: 4, 512>}, {transform_indices = @transform_3, window_bounds = array<i64: 4, 512>}, {pipeline_mode = #tpu.pipeline_mode<synchronous>, transform_indices = @transform_4, window_bounds = array<i64: 8, 72>}, {pipeline_mode = #tpu.pipeline_mode<synchronous>, transform_indices = @transform_5, window_bounds = array<i64: 8, 1>}, {pipeline_mode = #tpu.pipeline_mode<synchronous>, transform_indices = @transform_6, window_bounds = array<i64: 4, 72>}, {pipeline_mode = #tpu.pipeline_mode<synchronous>, transform_indices = @transform_7, window_bounds = array<i64: 4, 1>}, {pipeline_mode = #tpu.pipeline_mode<synchronous>, transform_indices = @transform_8, window_bounds = array<i64: 4, 36>}, {pipeline_mode = #tpu.pipeline_mode<synchronous>, transform_indices = @transform_9, window_bounds = array<i64: 4, 1>}, {transform_indices = @transform_10, window_bounds = array<i64: 4, 512>}]} {
    %c0 = arith.constant 0 : index
    %c0_0 = arith.constant 0 : index
    %0 = vector.load %arg1[%c0, %c0_0] : memref<72x512xf32, #tpu.memory_space<vmem>>, vector<72x512xf32>
    %c0_1 = arith.constant 0 : index
    %c0_2 = arith.constant 0 : index
    %1 = vector.load %arg2[%c0_1, %c0_2] : memref<36x512xf32, #tpu.memory_space<vmem>>, vector<36x512xf32>
    %c0_3 = arith.constant 0 : index
    %c0_4 = arith.constant 0 : index
    %2 = vector.load %arg3[%c0_3, %c0_4] : memref<4x512xf32, #tpu.memory_space<vmem>>, vector<4x512xf32>
    %c0_5 = arith.constant 0 : index
    %c0_6 = arith.constant 0 : index
    %3 = vector.load %arg4[%c0_5, %c0_6] : memref<4x512xf32, #tpu.memory_space<vmem>>, vector<4x512xf32>
    %4 = tpu.concatenate %2, %3 in 0 : vector<4x512xf32>, vector<4x512xf32> -> vector<8x512xf32>
    %c17_i32 = arith.constant 17 : i32
    %5 = tpu.dynamic_rotate %4 by %c17_i32 dim 1 : vector<8x512xf32>, i32 -> vector<8x512xf32>
    %c16_i32 = arith.constant 16 : i32
    %6 = tpu.dynamic_rotate %4 by %c16_i32 dim 1 : vector<8x512xf32>, i32 -> vector<8x512xf32>
    %c15_i32 = arith.constant 15 : i32
    %7 = tpu.dynamic_rotate %4 by %c15_i32 dim 1 : vector<8x512xf32>, i32 -> vector<8x512xf32>
    %c1_i32 = arith.constant 1 : i32
    %8 = tpu.dynamic_rotate %4 by %c1_i32 dim 1 : vector<8x512xf32>, i32 -> vector<8x512xf32>
    %c511_i32 = arith.constant 511 : i32
    %9 = tpu.dynamic_rotate %4 by %c511_i32 dim 1 : vector<8x512xf32>, i32 -> vector<8x512xf32>
    %c497_i32 = arith.constant 497 : i32
    %10 = tpu.dynamic_rotate %4 by %c497_i32 dim 1 : vector<8x512xf32>, i32 -> vector<8x512xf32>
    %c496_i32 = arith.constant 496 : i32
    %11 = tpu.dynamic_rotate %4 by %c496_i32 dim 1 : vector<8x512xf32>, i32 -> vector<8x512xf32>
    %c495_i32 = arith.constant 495 : i32
    %12 = tpu.dynamic_rotate %4 by %c495_i32 dim 1 : vector<8x512xf32>, i32 -> vector<8x512xf32>
    %13 = tpu.concatenate %5, %6, %7, %8, %4, %9, %10, %11, %12 in 0 : vector<8x512xf32>, vector<8x512xf32>, vector<8x512xf32>, vector<8x512xf32>, vector<8x512xf32>, vector<8x512xf32>, vector<8x512xf32>, vector<8x512xf32>, vector<8x512xf32> -> vector<72x512xf32>
    %14 = arith.mulf %13, %0 : vector<72x512xf32>
    %c0_7 = arith.constant 0 : index
    %c0_8 = arith.constant 0 : index
    %15 = vector.load %arg5[%c0_7, %c0_8] : memref<8x72xf32, #tpu.memory_space<vmem>>, vector<8x72xf32>
    %cst = arith.constant dense<0.000000e+00> : vector<8x512xf32>
    %16 = tpu.matmul %15, %14, %cst {dimension_numbers = #tpu.dot_dimension_numbers<[1], [0], [0], [1], [0, 0, 1, 1], [], []>} : vector<8x72xf32>, vector<72x512xf32>, vector<8x512xf32> -> vector<8x512xf32>
    %c0_9 = arith.constant 0 : index
    %c0_10 = arith.constant 0 : index
    %17 = vector.load %arg6[%c0_9, %c0_10] : memref<8x1xf32, #tpu.memory_space<vmem>>, vector<8x1xf32>
    %18 = vector.broadcast %17 : vector<8x1xf32> to vector<8x512xf32>
    %19 = arith.addf %16, %18 : vector<8x512xf32>
    %cst_11 = arith.constant 0.000000e+00 : f32
    %20 = vector.broadcast %cst_11 : f32 to vector<8x512xf32>
    %21 = arith.maximumf %19, %20 : vector<8x512xf32>
    %c17_i32_12 = arith.constant 17 : i32
    %22 = tpu.dynamic_rotate %21 by %c17_i32_12 dim 1 : vector<8x512xf32>, i32 -> vector<8x512xf32>
    %c16_i32_13 = arith.constant 16 : i32
    %23 = tpu.dynamic_rotate %21 by %c16_i32_13 dim 1 : vector<8x512xf32>, i32 -> vector<8x512xf32>
    %c15_i32_14 = arith.constant 15 : i32
    %24 = tpu.dynamic_rotate %21 by %c15_i32_14 dim 1 : vector<8x512xf32>, i32 -> vector<8x512xf32>
    %c1_i32_15 = arith.constant 1 : i32
    %25 = tpu.dynamic_rotate %21 by %c1_i32_15 dim 1 : vector<8x512xf32>, i32 -> vector<8x512xf32>
    %c511_i32_16 = arith.constant 511 : i32
    %26 = tpu.dynamic_rotate %21 by %c511_i32_16 dim 1 : vector<8x512xf32>, i32 -> vector<8x512xf32>
    %c497_i32_17 = arith.constant 497 : i32
    %27 = tpu.dynamic_rotate %21 by %c497_i32_17 dim 1 : vector<8x512xf32>, i32 -> vector<8x512xf32>
    %c496_i32_18 = arith.constant 496 : i32
    %28 = tpu.dynamic_rotate %21 by %c496_i32_18 dim 1 : vector<8x512xf32>, i32 -> vector<8x512xf32>
    %c495_i32_19 = arith.constant 495 : i32
    %29 = tpu.dynamic_rotate %21 by %c495_i32_19 dim 1 : vector<8x512xf32>, i32 -> vector<8x512xf32>
    %30 = tpu.concatenate %22, %23, %24, %25, %21, %26, %27, %28, %29 in 0 : vector<8x512xf32>, vector<8x512xf32>, vector<8x512xf32>, vector<8x512xf32>, vector<8x512xf32>, vector<8x512xf32>, vector<8x512xf32>, vector<8x512xf32>, vector<8x512xf32> -> vector<72x512xf32>
    %31 = arith.mulf %30, %0 : vector<72x512xf32>
    %c0_20 = arith.constant 0 : index
    %c0_21 = arith.constant 0 : index
    %32 = vector.load %arg7[%c0_20, %c0_21] : memref<4x72xf32, #tpu.memory_space<vmem>>, vector<4x72xf32>
    %cst_22 = arith.constant dense<0.000000e+00> : vector<4x512xf32>
    %33 = tpu.matmul %32, %31, %cst_22 {dimension_numbers = #tpu.dot_dimension_numbers<[1], [0], [0], [1], [0, 0, 1, 1], [], []>} : vector<4x72xf32>, vector<72x512xf32>, vector<4x512xf32> -> vector<4x512xf32>
    %c0_23 = arith.constant 0 : index
    %c0_24 = arith.constant 0 : index
    %34 = vector.load %arg8[%c0_23, %c0_24] : memref<4x1xf32, #tpu.memory_space<vmem>>, vector<4x1xf32>
    %35 = vector.broadcast %34 : vector<4x1xf32> to vector<4x512xf32>
    %36 = arith.addf %33, %35 : vector<4x512xf32>
    %cst_25 = arith.constant 0.000000e+00 : f32
    %37 = vector.broadcast %cst_25 : f32 to vector<4x512xf32>
    %38 = arith.maximumf %36, %37 : vector<4x512xf32>
    %c17_i32_26 = arith.constant 17 : i32
    %39 = tpu.dynamic_rotate %38 by %c17_i32_26 dim 1 : vector<4x512xf32>, i32 -> vector<4x512xf32>
    %c16_i32_27 = arith.constant 16 : i32
    %40 = tpu.dynamic_rotate %38 by %c16_i32_27 dim 1 : vector<4x512xf32>, i32 -> vector<4x512xf32>
    %c15_i32_28 = arith.constant 15 : i32
    %41 = tpu.dynamic_rotate %38 by %c15_i32_28 dim 1 : vector<4x512xf32>, i32 -> vector<4x512xf32>
    %c1_i32_29 = arith.constant 1 : i32
    %42 = tpu.dynamic_rotate %38 by %c1_i32_29 dim 1 : vector<4x512xf32>, i32 -> vector<4x512xf32>
    %c511_i32_30 = arith.constant 511 : i32
    %43 = tpu.dynamic_rotate %38 by %c511_i32_30 dim 1 : vector<4x512xf32>, i32 -> vector<4x512xf32>
    %c497_i32_31 = arith.constant 497 : i32
    %44 = tpu.dynamic_rotate %38 by %c497_i32_31 dim 1 : vector<4x512xf32>, i32 -> vector<4x512xf32>
    %c496_i32_32 = arith.constant 496 : i32
    %45 = tpu.dynamic_rotate %38 by %c496_i32_32 dim 1 : vector<4x512xf32>, i32 -> vector<4x512xf32>
    %c495_i32_33 = arith.constant 495 : i32
    %46 = tpu.dynamic_rotate %38 by %c495_i32_33 dim 1 : vector<4x512xf32>, i32 -> vector<4x512xf32>
    %47 = tpu.concatenate %39, %40, %41, %42, %38, %43, %44, %45, %46 in 0 : vector<4x512xf32>, vector<4x512xf32>, vector<4x512xf32>, vector<4x512xf32>, vector<4x512xf32>, vector<4x512xf32>, vector<4x512xf32>, vector<4x512xf32>, vector<4x512xf32> -> vector<36x512xf32>
    %48 = arith.mulf %47, %1 : vector<36x512xf32>
    %c0_34 = arith.constant 0 : index
    %c0_35 = arith.constant 0 : index
    %49 = vector.load %arg9[%c0_34, %c0_35] : memref<4x36xf32, #tpu.memory_space<vmem>>, vector<4x36xf32>
    %cst_36 = arith.constant dense<0.000000e+00> : vector<4x512xf32>
    %50 = tpu.matmul %49, %48, %cst_36 {dimension_numbers = #tpu.dot_dimension_numbers<[1], [0], [0], [1], [0, 0, 1, 1], [], []>} : vector<4x36xf32>, vector<36x512xf32>, vector<4x512xf32> -> vector<4x512xf32>
    %c0_37 = arith.constant 0 : index
    %c0_38 = arith.constant 0 : index
    %51 = vector.load %arg10[%c0_37, %c0_38] : memref<4x1xf32, #tpu.memory_space<vmem>>, vector<4x1xf32>
    %52 = vector.broadcast %51 : vector<4x1xf32> to vector<4x512xf32>
    %53 = arith.addf %50, %52 : vector<4x512xf32>
    %c0_39 = arith.constant 0 : index
    %c0_40 = arith.constant 0 : index
    %54 = vector.load %arg11[%c0_39, %c0_40] : memref<4x512xf32, #tpu.memory_space<vmem>>, vector<4x512xf32>
    tpu.vector_store %arg11[%c0_39, %c0_40], %53 {strides = array<i32>} : memref<4x512xf32, #tpu.memory_space<vmem>>, vector<4x512xf32>,
    return
  }
  func.func @transform_0(%arg0: i32) -> (i32, i32) {
    %c0_i32 = arith.constant 0 : i32
    %c0_i32_0 = arith.constant 0 : i32
    %c0_i32_1 = arith.constant 0 : i32
    return %c0_i32, %c0_i32_0 : i32, i32
  }
  func.func @transform_1(%arg0: i32) -> (i32, i32) {
    %c0_i32 = arith.constant 0 : i32
    %c0_i32_0 = arith.constant 0 : i32
    %c0_i32_1 = arith.constant 0 : i32
    return %c0_i32, %c0_i32_0 : i32, i32
  }
  func.func @transform_2(%arg0: i32) -> (i32, i32) {
    %c0_i32 = arith.constant 0 : i32
    %c0_i32_0 = arith.constant 0 : i32
    return %c0_i32, %arg0 : i32, i32
  }
  func.func @transform_3(%arg0: i32) -> (i32, i32) {
    %c0_i32 = arith.constant 0 : i32
    %c0_i32_0 = arith.constant 0 : i32
    return %c0_i32, %arg0 : i32, i32
  }
  func.func @transform_4(%arg0: i32) -> (i32, i32) {
    %c0_i32 = arith.constant 0 : i32
    %c0_i32_0 = arith.constant 0 : i32
    %c0_i32_1 = arith.constant 0 : i32
    return %c0_i32, %c0_i32_0 : i32, i32
  }
  func.func @transform_5(%arg0: i32) -> (i32, i32) {
    %c0_i32 = arith.constant 0 : i32
    %c0_i32_0 = arith.constant 0 : i32
    %c0_i32_1 = arith.constant 0 : i32
    return %c0_i32, %c0_i32_0 : i32, i32
  }
  func.func @transform_6(%arg0: i32) -> (i32, i32) {
    %c0_i32 = arith.constant 0 : i32
    %c0_i32_0 = arith.constant 0 : i32
    %c0_i32_1 = arith.constant 0 : i32
    return %c0_i32, %c0_i32_0 : i32, i32
  }
  func.func @transform_7(%arg0: i32) -> (i32, i32) {
    %c0_i32 = arith.constant 0 : i32
    %c0_i32_0 = arith.constant 0 : i32
    %c0_i32_1 = arith.constant 0 : i32
    return %c0_i32, %c0_i32_0 : i32, i32
  }
  func.func @transform_8(%arg0: i32) -> (i32, i32) {
    %c0_i32 = arith.constant 0 : i32
    %c0_i32_0 = arith.constant 0 : i32
    %c0_i32_1 = arith.constant 0 : i32
    return %c0_i32, %c0_i32_0 : i32, i32
  }
  func.func @transform_9(%arg0: i32) -> (i32, i32) {
    %c0_i32 = arith.constant 0 : i32
    %c0_i32_0 = arith.constant 0 : i32
    %c0_i32_1 = arith.constant 0 : i32
    return %c0_i32, %c0_i32_0 : i32, i32
  }
  func.func @transform_10(%arg0: i32) -> (i32, i32) {
    %c0_i32 = arith.constant 0 : i32
    %c0_i32_0 = arith.constant 0 : i32
    return %c0_i32, %arg0 : i32, i32
  }
}

</mosaic_0001>

<llo_original>
// kernel: tpu_custom_call.1
$region0: #{tpu_custom_call.1}
  #allocation0 [shape = 'u32[]', space=smem, size = 0x4, offset = 0x4, fixed_abs, tag = 'smem constant byte address 0x4 - core index']
  #allocation1 [shape = 'u32[144,128]{1,0:T(1,128)}', space=vmem, size = 0x12000, scoped, tag = 'internal scratch']
  %s0 = inlined_call_operand.hbm [shape: f32[72,512], index: 0, kind: input, shape index: {}]
  %s1 = inlined_call_operand.hbm [shape: f32[36,512], index: 1, kind: input, shape index: {}]
  %s2 = inlined_call_operand.vmem [shape: f32[4,512], index: 2, kind: input, shape index: {}]
  %s3 = inlined_call_operand.hbm [shape: f32[4,512], index: 3, kind: input, shape index: {}]
  %s4 = inlined_call_operand.vmem [shape: f32[8,72], index: 4, kind: input, shape index: {}]
  %s5 = inlined_call_operand.vmem [shape: f32[8,1], index: 5, kind: input, shape index: {}]
  %s6 = inlined_call_operand.vmem [shape: f32[4,72], index: 6, kind: input, shape index: {}]
  %s7 = inlined_call_operand.vmem [shape: f32[4,1], index: 7, kind: input, shape index: {}]
  %s8 = inlined_call_operand.vmem [shape: f32[4,36], index: 8, kind: input, shape index: {}]
  %s9 = inlined_call_operand.vmem [shape: f32[4,1], index: 9, kind: input, shape index: {}]
  %s10 = inlined_call_operand.hbm [shape: f32[4,512], index: 10, kind: output, shape index: {}]
  %s11 = sld [smem:[#allocation0]]
  $region62: #{tpu_custom_call.1} parent=0
    _
  %s13 = ssub.s32 1, %s11
  %s14 = scalar_select 0, %s13, %s11
  $region1: #{tpu_custom_call.1} parent=0
    #allocation2 [shape = 'u8[147456]{0}', space=vmem, size = 0x24000, scoped, tag = 'input window, operand 0, single buffered']
    #allocation3 [shape = 's32[1]{0}', space=sflag, size = 0x4, scoped, tag = 'scoped memory for tpu_custom_call.1']
    #allocation4 [shape = 's32[1]{0}', space=sflag, size = 0x4, scoped, tag = 'scoped memory for tpu_custom_call.1']
    #allocation5 [shape = 'u8[81920]{0}', space=vmem, size = 0x14000, scoped, tag = 'input window, operand 1, single buffered']
    #allocation6 [shape = 's32[1]{0}', space=sflag, size = 0x4, scoped, tag = 'scoped memory for tpu_custom_call.1']
    #allocation7 [shape = 'u8[8192]{0}', space=vmem, size = 0x2000, scoped, tag = 'input window, operand 3, single buffered']
    #allocation8 [shape = 'u8[8192]{0}', space=vmem, size = 0x2000, scoped, tag = 'output window, operand 0, single buffered']
    %15 = vsyncpa [#allocation3], 0
    %16 = vsyncpa [#allocation6], 0
    %17 = vsyncpa [#allocation4], 0
    // Predicated region
    $region2: #{tpu_custom_call.1} parent=1 // pred_check
      _
    $region3: #{tpu_custom_call.1} parent=1 // pred_check_branch
      %19 = sbr.rel (0) target = $region5
    $region4: #{tpu_custom_call.1} parent=1 // pred_region
      %s21 = ssub.s32 4608, 4608
      %22 = vsyncadd [#allocation3], %s21
      %s23 = sshll.u32 [#allocation2], 4
      %s24 = int_to_ptr.vmem [resolvable:$true] %s23
      %29 = dma.hbm_to_vmem [thread:$0]  %s0, 4608, %s24, [#allocation3], 512, 512, 32
    $region5: #{tpu_custom_call.1} parent=1 // pred_fallthru
      _
    // Predicated region
    $region6: #{tpu_custom_call.1} parent=1 // pred_check
      _
    $region7: #{tpu_custom_call.1} parent=1 // pred_check_branch
      %31 = sbr.rel (0) target = $region9
    $region8: #{tpu_custom_call.1} parent=1 // pred_region
      %s33 = ssub.s32 2560, 2560
      %34 = vsyncadd [#allocation6], %s33
      %s35 = sshll.u32 [#allocation5], 4
      %s36 = int_to_ptr.vmem [resolvable:$true] %s35
      %41 = dma.hbm_to_vmem [thread:$0]  %s1, 2560, %s36, [#allocation6], 512, 512, 32
    $region9: #{tpu_custom_call.1} parent=1 // pred_fallthru
      _
    // Predicated region
    $region10: #{tpu_custom_call.1} parent=1 // pred_check
      _
    $region11: #{tpu_custom_call.1} parent=1 // pred_check_branch
      %43 = sbr.rel (0) target = $region13
    $region12: #{tpu_custom_call.1} parent=1 // pred_region
      _
    $region13: #{tpu_custom_call.1} parent=1 // pred_fallthru
      _
    // Predicated region
    $region14: #{tpu_custom_call.1} parent=1 // pred_check
      _
    $region15: #{tpu_custom_call.1} parent=1 // pred_check_branch
      %45 = sbr.rel (0) target = $region17
    $region16: #{tpu_custom_call.1} parent=1 // pred_region
      %s47 = ssub.s32 256, 256
      %48 = vsyncadd [#allocation6], %s47
      %s50 = sshll.u32 [#allocation7], 4
      %s51 = int_to_ptr.vmem [resolvable:$true] %s50
      %53 = dma.hbm_to_vmem [thread:$0]  %s3, 256, %s51, [#allocation6]
    $region17: #{tpu_custom_call.1} parent=1 // pred_fallthru
      _
    // Predicated region
    $region18: #{tpu_custom_call.1} parent=1 // pred_check
      _
    $region19: #{tpu_custom_call.1} parent=1 // pred_check_branch
      %55 = sbr.rel (0) target = $region21
    $region20: #{tpu_custom_call.1} parent=1 // pred_region
      _
    $region21: #{tpu_custom_call.1} parent=1 // pred_fallthru
      _
    // Predicated region
    $region22: #{tpu_custom_call.1} parent=1 // pred_check
      _
    $region23: #{tpu_custom_call.1} parent=1 // pred_check_branch
      %57 = sbr.rel (0) target = $region25
    $region24: #{tpu_custom_call.1} parent=1 // pred_region
      _
    $region25: #{tpu_custom_call.1} parent=1 // pred_fallthru
      _
    // Predicated region
    $region26: #{tpu_custom_call.1} parent=1 // pred_check
      _
    $region27: #{tpu_custom_call.1} parent=1 // pred_check_branch
      %59 = sbr.rel (0) target = $region29
    $region28: #{tpu_custom_call.1} parent=1 // pred_region
      _
    $region29: #{tpu_custom_call.1} parent=1 // pred_fallthru
      _
    // Predicated region
    $region30: #{tpu_custom_call.1} parent=1 // pred_check
      _
    $region31: #{tpu_custom_call.1} parent=1 // pred_check_branch
      %61 = sbr.rel (0) target = $region33
    $region32: #{tpu_custom_call.1} parent=1 // pred_region
      _
    $region33: #{tpu_custom_call.1} parent=1 // pred_fallthru
      _
    // Predicated region
    $region34: #{tpu_custom_call.1} parent=1 // pred_check
      _
    $region35: #{tpu_custom_call.1} parent=1 // pred_check_branch
      %63 = sbr.rel (0) target = $region37
    $region36: #{tpu_custom_call.1} parent=1 // pred_region
      _
    $region37: #{tpu_custom_call.1} parent=1 // pred_fallthru
      _
    // Predicated region
    $region38: #{tpu_custom_call.1} parent=1 // pred_check
      _
    $region39: #{tpu_custom_call.1} parent=1 // pred_check_branch
      %65 = sbr.rel (0) target = $region41
    $region40: #{tpu_custom_call.1} parent=1 // pred_region
      _
    $region41: #{tpu_custom_call.1} parent=1 // pred_fallthru
      _
    // Predicated region
    $region42: #{tpu_custom_call.1} parent=1 // pred_check
      _
    $region43: #{tpu_custom_call.1} parent=1 // pred_check_branch
      %67 = sbr.rel (0) target = $region45
    $region44: #{tpu_custom_call.1} parent=1 // pred_region
      %68 = dma.done [#allocation3], 4608
    $region45: #{tpu_custom_call.1} parent=1 // pred_fallthru
      _
    // Predicated region
    $region46: #{tpu_custom_call.1} parent=1 // pred_check
      _
    $region47: #{tpu_custom_call.1} parent=1 // pred_check_branch
      %70 = sbr.rel (0) target = $region49
    $region48: #{tpu_custom_call.1} parent=1 // pred_region
      %71 = dma.done [#allocation6], 2560
    $region49: #{tpu_custom_call.1} parent=1 // pred_fallthru
      _
    // Predicated region
    $region50: #{tpu_custom_call.1} parent=1 // pred_check
      _
    $region51: #{tpu_custom_call.1} parent=1 // pred_check_branch
      %73 = sbr.rel (0) target = $region53
    $region52: #{tpu_custom_call.1} parent=1 // pred_region
      %74 = dma.done [#allocation6], 256
    $region53: #{tpu_custom_call.1} parent=1 // pred_fallthru
      _
    %v75 = vld [vmem:[#allocation2] sm:$0xff]
    %v76 = vld [vmem:[#allocation2 + $0x8] sm:$0xff]
    %v77 = vld [vmem:[#allocation2 + $0x10] sm:$0xff]
    %v78 = vld [vmem:[#allocation2 + $0x18] sm:$0xff]
    %v79 = vld [vmem:[#allocation2 + $0x20] sm:$0xff]
    %v80 = vld [vmem:[#allocation2 + $0x28] sm:$0xff]
    %v81 = vld [vmem:[#allocation2 + $0x30] sm:$0xff]
    %v82 = vld [vmem:[#allocation2 + $0x38] sm:$0xff]
    %v83 = vld [vmem:[#allocation2 + $0x40] sm:$0xff]
    %v84 = vld [vmem:[#allocation2 + $0x48] sm:$0xff]
    %v85 = vld [vmem:[#allocation2 + $0x50] sm:$0xff]
    %v86 = vld [vmem:[#allocation2 + $0x58] sm:$0xff]
    %v87 = vld [vmem:[#allocation2 + $0x60] sm:$0xff]
    %v88 = vld [vmem:[#allocation2 + $0x68] sm:$0xff]
    %v89 = vld [vmem:[#allocation2 + $0x70] sm:$0xff]
    %v90 = vld [vmem:[#allocation2 + $0x78] sm:$0xff]
    %v91 = vld [vmem:[#allocation2 + $0x80] sm:$0xff]
    %v92 = vld [vmem:[#allocation2 + $0x88] sm:$0xff]
    %v93 = vld [vmem:[#allocation2 + $0x90] sm:$0xff]
    %v94 = vld [vmem:[#allocation2 + $0x98] sm:$0xff]
    %v95 = vld [vmem:[#allocation2 + $0xa0] sm:$0xff]
    %v96 = vld [vmem:[#allocation2 + $0xa8] sm:$0xff]
    %v97 = vld [vmem:[#allocation2 + $0xb0] sm:$0xff]
    %v98 = vld [vmem:[#allocation2 + $0xb8] sm:$0xff]
    %v99 = vld [vmem:[#allocation2 + $0xc0] sm:$0xff]
    %v100 = vld [vmem:[#allocation2 + $0xc8] sm:$0xff]
    %v101 = vld [vmem:[#allocation2 + $0xd0] sm:$0xff]
    %v102 = vld [vmem:[#allocation2 + $0xd8] sm:$0xff]
    %v103 = vld [vmem:[#allocation2 + $0xe0] sm:$0xff]
    %v104 = vld [vmem:[#allocation2 + $0xe8] sm:$0xff]
    %v105 = vld [vmem:[#allocation2 + $0xf0] sm:$0xff]
    %v106 = vld [vmem:[#allocation2 + $0xf8] sm:$0xff]
    %v107 = vld [vmem:[#allocation2 + $0x100] sm:$0xff]
    %v108 = vld [vmem:[#allocation2 + $0x108] sm:$0xff]
    %v109 = vld [vmem:[#allocation2 + $0x110] sm:$0xff]
    %v110 = vld [vmem:[#allocation2 + $0x118] sm:$0xff]
    %v111 = vld [vmem:[#allocation5] sm:$0xff]
    %v112 = vld [vmem:[#allocation5 + $0x8] sm:$0xff]
    %v113 = vld [vmem:[#allocation5 + $0x10] sm:$0xff]
    %v114 = vld [vmem:[#allocation5 + $0x18] sm:$0xff]
    %v115 = vld [vmem:[#allocation5 + $0x20] sm:$0xff]
    %v116 = vld [vmem:[#allocation5 + $0x28] sm:$0xff]
    %v117 = vld [vmem:[#allocation5 + $0x30] sm:$0xff]
    %v118 = vld [vmem:[#allocation5 + $0x38] sm:$0xff]
    %v119 = vld [vmem:[#allocation5 + $0x40] sm:$0xff]
    %v120 = vld [vmem:[#allocation5 + $0x48] sm:$0xff]
    %v121 = vld [vmem:[#allocation5 + $0x50] sm:$0xff]
    %v122 = vld [vmem:[#allocation5 + $0x58] sm:$0xff]
    %v123 = vld [vmem:[#allocation5 + $0x60] sm:$0xff]
    %v124 = vld [vmem:[#allocation5 + $0x68] sm:$0xff]
    %v125 = vld [vmem:[#allocation5 + $0x70] sm:$0xff]
    %v126 = vld [vmem:[#allocation5 + $0x78] sm:$0xff]
    %v127 = vld [vmem:[#allocation5 + $0x80] sm:$0xf]
    %v128 = vld [vmem:[#allocation5 + $0x88] sm:$0xf]
    %v129 = vld [vmem:[#allocation5 + $0x90] sm:$0xf]
    %v130 = vld [vmem:[#allocation5 + $0x98] sm:$0xf]
    %v131 = vld [vmem:[%s2] sm:$0xff]
    %v132 = vld [vmem:[%s2 + $0x8] sm:$0xff]
    %v133 = vld [vmem:[#allocation7] sm:$0xff]
    %v134 = vld [vmem:[#allocation7 + $0x8] sm:$0xff]
    %v137 = vcombine.high %v131, %v131
    %v138 = vcombine.high %v132, %v132
    %v143 = vcombine.low %v133, %v133
    %v144 = vcombine.low %v134, %v134
    %vm147 = vcmask 1043456
    %v148 = vsel %vm147, %v131, %v143
    %v149 = vsel %vm147, %v137, %v133
    %v150 = vsel %vm147, %v132, %v144
    %v151 = vsel %vm147, %v138, %v134
    %152 = vrot.lane.b32.xlu0 %v148, 17
    %v153 = vpop.permute.xlu0 %152
    %154 = vrot.lane.b32.xlu0 %v149, 17
    %v155 = vpop.permute.xlu0 %154
    %156 = vrot.lane.b32.xlu0 %v150, 17
    %v157 = vpop.permute.xlu0 %156
    %158 = vrot.lane.b32.xlu0 %v151, 17
    %v159 = vpop.permute.xlu0 %158
    %v160 = vlaneseq
    %v161 = vand.u32 %v160, 127
    %vm162 = vcmp.lt.s32.totalorder %v161, 17
    %v163 = vsel %vm162, %v157, %v159
    %v164 = vsel %vm162, %v155, %v157
    %v165 = vsel %vm162, %v153, %v155
    %v166 = vsel %vm162, %v159, %v153
    %167 = vrot.lane.b32.xlu0 %v148, 16
    %v168 = vpop.permute.xlu0 %167
    %169 = vrot.lane.b32.xlu0 %v149, 16
    %v170 = vpop.permute.xlu0 %169
    %171 = vrot.lane.b32.xlu0 %v150, 16
    %v172 = vpop.permute.xlu0 %171
    %173 = vrot.lane.b32.xlu0 %v151, 16
    %v174 = vpop.permute.xlu0 %173
    %vm175 = vcmp.lt.s32.totalorder %v161, 16
    %v176 = vsel %vm175, %v172, %v174
    %v177 = vsel %vm175, %v170, %v172
    %v178 = vsel %vm175, %v168, %v170
    %v179 = vsel %vm175, %v174, %v168
    %180 = vrot.lane.b32.xlu0 %v148, 15
    %v181 = vpop.permute.xlu0 %180
    %182 = vrot.lane.b32.xlu0 %v149, 15
    %v183 = vpop.permute.xlu0 %182
    %184 = vrot.lane.b32.xlu0 %v150, 15
    %v185 = vpop.permute.xlu0 %184
    %186 = vrot.lane.b32.xlu0 %v151, 15
    %v187 = vpop.permute.xlu0 %186
    %vm188 = vcmp.lt.s32.totalorder %v161, 15
    %v189 = vsel %vm188, %v185, %v187
    %v190 = vsel %vm188, %v183, %v185
    %v191 = vsel %vm188, %v181, %v183
    %v192 = vsel %vm188, %v187, %v181
    %193 = vrot.lane.b32.xlu0 %v148, 1
    %v194 = vpop.permute.xlu0 %193
    %195 = vrot.lane.b32.xlu0 %v149, 1
    %v196 = vpop.permute.xlu0 %195
    %197 = vrot.lane.b32.xlu0 %v150, 1
    %v198 = vpop.permute.xlu0 %197
    %199 = vrot.lane.b32.xlu0 %v151, 1
    %v200 = vpop.permute.xlu0 %199
    %vm201 = vcmp.lt.s32.totalorder %v161, 1
    %v202 = vsel %vm201, %v198, %v200
    %v203 = vsel %vm201, %v196, %v198
    %v204 = vsel %vm201, %v194, %v196
    %v205 = vsel %vm201, %v200, %v194
    %206 = vrot.lane.b32.xlu0 %v148, 127
    %v207 = vpop.permute.xlu0 %206
    %208 = vrot.lane.b32.xlu0 %v149, 127
    %v209 = vpop.permute.xlu0 %208
    %210 = vrot.lane.b32.xlu0 %v150, 127
    %v211 = vpop.permute.xlu0 %210
    %212 = vrot.lane.b32.xlu0 %v151, 127
    %v213 = vpop.permute.xlu0 %212
    %vm214 = vcmp.lt.s32.totalorder %v161, 127
    %v215 = vsel %vm214, %v211, %v213
    %v216 = vsel %vm214, %v209, %v211
    %v217 = vsel %vm214, %v207, %v209
    %v218 = vsel %vm214, %v213, %v207
    %219 = vrot.lane.b32.xlu0 %v148, 113
    %v220 = vpop.permute.xlu0 %219
    %221 = vrot.lane.b32.xlu0 %v149, 113
    %v222 = vpop.permute.xlu0 %221
    %223 = vrot.lane.b32.xlu0 %v150, 113
    %v224 = vpop.permute.xlu0 %223
    %225 = vrot.lane.b32.xlu0 %v151, 113
    %v226 = vpop.permute.xlu0 %225
    %vm227 = vcmp.lt.s32.totalorder %v161, 113
    %v228 = vsel %vm227, %v224, %v226
    %v229 = vsel %vm227, %v222, %v224
    %v230 = vsel %vm227, %v220, %v222
    %v231 = vsel %vm227, %v226, %v220
    %232 = vrot.lane.b32.xlu0 %v148, 112
    %v233 = vpop.permute.xlu0 %232
    %234 = vrot.lane.b32.xlu0 %v149, 112
    %v235 = vpop.permute.xlu0 %234
    %236 = vrot.lane.b32.xlu0 %v150, 112
    %v237 = vpop.permute.xlu0 %236
    %238 = vrot.lane.b32.xlu0 %v151, 112
    %v239 = vpop.permute.xlu0 %238
    %vm240 = vcmp.lt.s32.totalorder %v161, 112
    %v241 = vsel %vm240, %v237, %v239
    %v242 = vsel %vm240, %v235, %v237
    %v243 = vsel %vm240, %v233, %v235
    %v244 = vsel %vm240, %v239, %v233
    %245 = vrot.lane.b32.xlu0 %v148, 111
    %v246 = vpop.permute.xlu0 %245
    %247 = vrot.lane.b32.xlu0 %v149, 111
    %v248 = vpop.permute.xlu0 %247
    %249 = vrot.lane.b32.xlu0 %v150, 111
    %v250 = vpop.permute.xlu0 %249
    %251 = vrot.lane.b32.xlu0 %v151, 111
    %v252 = vpop.permute.xlu0 %251
    %vm253 = vcmp.lt.s32.totalorder %v161, 111
    %v254 = vsel %vm253, %v250, %v252
    %v255 = vsel %vm253, %v248, %v250
    %v256 = vsel %vm253, %v246, %v248
    %v257 = vsel %vm253, %v252, %v246
    %v258 = vmul.f32 %v166, %v75
    %v259 = vmul.f32 %v165, %v76
    %v260 = vmul.f32 %v164, %v77
    %v261 = vmul.f32 %v163, %v78
    %v262 = vmul.f32 %v179, %v79
    %v263 = vmul.f32 %v178, %v80
    %v264 = vmul.f32 %v177, %v81
    %v265 = vmul.f32 %v176, %v82
    %v266 = vmul.f32 %v192, %v83
    %v267 = vmul.f32 %v191, %v84
    %v268 = vmul.f32 %v190, %v85
    %v269 = vmul.f32 %v189, %v86
    %v270 = vmul.f32 %v205, %v87
    %v271 = vmul.f32 %v204, %v88
    %v272 = vmul.f32 %v203, %v89
    %v273 = vmul.f32 %v202, %v90
    %v274 = vmul.f32 %v148, %v91
    %v275 = vmul.f32 %v149, %v92
    %v276 = vmul.f32 %v150, %v93
    %v277 = vmul.f32 %v151, %v94
    %v278 = vmul.f32 %v217, %v95
    %v279 = vmul.f32 %v216, %v96
    %v280 = vmul.f32 %v215, %v97
    %v281 = vmul.f32 %v218, %v98
    %v282 = vmul.f32 %v230, %v99
    %v283 = vmul.f32 %v229, %v100
    %v284 = vmul.f32 %v228, %v101
    %v285 = vmul.f32 %v231, %v102
    %v286 = vmul.f32 %v243, %v103
    %v287 = vmul.f32 %v242, %v104
    %v288 = vmul.f32 %v241, %v105
    %v289 = vmul.f32 %v244, %v106
    %v290 = vmul.f32 %v256, %v107
    %v291 = vmul.f32 %v255, %v108
    %v292 = vmul.f32 %v254, %v109
    %v293 = vmul.f32 %v257, %v110
    %v294 = vld [vmem:[%s4] sm:$0xff]
    %v295 = vld [vmem:[%s5] sm:$0xff]
    %297 = vset.pattern.permute.xlu0 0
    %298 = vperm.xlu0 %297, %v295
    %v299 = vpop.permute.xlu0 %298
    %vm301 = vcmask 588800
    %v303 = vsel %vm301, %v294, 0
    %305 = vmatprep.subr.mxu0 %v259
    %306 = vmatpush1.msra.mxu0 %v258
    %307 = vmatprep.subr.mxu0 %v263
    %308 = vmatpush1.msra.mxu0 %v262
    %309 = vmatprep.subr.mxu0 %v267
    %310 = vmatpush1.msra.mxu0 %v266
    %311 = vmatprep.subr.mxu0 %v271
    %312 = vmatpush1.msra.mxu0 %v270
    %313 = vmatprep.subr.mxu0 %v275
    %314 = vmatpush1.msra.mxu0 %v274
    %315 = vmatprep.subr.mxu0 %v279
    %316 = vmatpush1.msra.mxu0 %v278
    %317 = vmatprep.subr.mxu0 %v283
    %318 = vmatpush1.msra.mxu0 %v282
    %319 = vmatprep.subr.mxu0 %v287
    %320 = vmatpush1.msra.mxu0 %v286
    %321 = vmatprep.subr.mxu0 %v291
    %322 = vmatpush1.msra.mxu0 %v290
    %323 = vmatprep.subr.mxu0 0.0
    %324 = vmatpush1.msra.mxu0 0.0
    %325 = vmatprep.subr.mxu0 0.0
    %326 = vmatpush1.msra.mxu0 0.0
    %327 = vmatprep.subr.mxu0 0.0
    %328 = vmatpush1.msra.mxu0 0.0
    %329 = vmatprep.subr.mxu0 0.0
    %330 = vmatpush1.msra.mxu0 0.0
    %331 = vmatprep.subr.mxu0 0.0
    %332 = vmatpush1.msra.mxu0 0.0
    %333 = vmatprep.subr.mxu0 0.0
    %334 = vmatpush1.msra.mxu0 0.0
    %335 = vmatprep.subr.mxu0 0.0
    %336 = vmatpush1.msra.mxu0 0.0
    %337 = vmatprep.subr.mxu0 0.0
    %338 = vmatpush1.msra.mxu0 0.0
    %339 = vmatprep.subr.mxu0 0.0
    %340 = vmatpush1.msra.mxu0 0.0
    %341 = vmatprep.subr.mxu0 0.0
    %342 = vmatpush1.msra.mxu0 0.0
    %343 = vmatprep.subr.mxu0 0.0
    %344 = vmatpush1.msra.mxu0 0.0
    %345 = vmatprep.subr.mxu0 0.0
    %346 = vmatpush1.msra.mxu0 0.0
    %347 = vmatprep.subr.mxu0 0.0
    %348 = vmatpush1.msra.mxu0 0.0
    %349 = vmatprep.subr.mxu0 0.0
    %350 = vmatpush1.msra.mxu0 0.0
    %351 = vmatprep.subr.mxu0 0.0
    %352 = vmatpush1.msra.mxu0 0.0
    %353 = vmatprep.subr.mxu0 0.0
    %354 = vmatpush1.msra.mxu0 0.0
    %355 = vmatprep.subr.mxu0 0.0
    %356 = vmatpush1.msra.mxu0 0.0
    %357 = vmatprep.subr.mxu0 0.0
    %358 = vmatpush1.msra.mxu0 0.0
    %359 = vmatprep.subr.mxu0 0.0
    %360 = vmatpush1.msra.mxu0 0.0
    %361 = vmatprep.subr.mxu0 0.0
    %362 = vmatpush1.msra.mxu0 0.0
    %363 = vmatprep.subr.mxu0 0.0
    %364 = vmatpush1.msra.mxu0 0.0
    %365 = vmatprep.subr.mxu0 0.0
    %366 = vmatpush1.msra.mxu0 0.0
    %367 = vmatprep.subr.mxu0 0.0
    %368 = vmatpush1.msra.mxu0 0.0
    %369 = vmatprep.mubr.f32.mxu0 0.0
    %370 = vmatmul.mubr.f32.gmra.mrb[0].mxu0 %v303
    %v371 = vpop.f32.mrb[0].mxu0
    %v372 = vadd.f32 %v299, %v371
    %v373 = vpop.f32.mrb[0].mxu0
    %v374 = vadd.f32 %v299, %v373
    %375 = vdwg.mxu0
    %376 = vmatprep.subr.mxu0 %v261
    %377 = vmatpush1.msra.mxu0 %v260
    %378 = vmatprep.subr.mxu0 %v265
    %379 = vmatpush1.msra.mxu0 %v264
    %380 = vmatprep.subr.mxu0 %v269
    %381 = vmatpush1.msra.mxu0 %v268
    %382 = vmatprep.subr.mxu0 %v273
    %383 = vmatpush1.msra.mxu0 %v272
    %384 = vmatprep.subr.mxu0 %v277
    %385 = vmatpush1.msra.mxu0 %v276
    %386 = vmatprep.subr.mxu0 %v281
    %387 = vmatpush1.msra.mxu0 %v280
    %388 = vmatprep.subr.mxu0 %v285
    %389 = vmatpush1.msra.mxu0 %v284
    %390 = vmatprep.subr.mxu0 %v289
    %391 = vmatpush1.msra.mxu0 %v288
    %392 = vmatprep.subr.mxu0 %v293
    %393 = vmatpush1.msra.mxu0 %v292
    %394 = vmatprep.subr.mxu0 0.0
    %395 = vmatpush1.msra.mxu0 0.0
    %396 = vmatprep.subr.mxu0 0.0
    %397 = vmatpush1.msra.mxu0 0.0
    %398 = vmatprep.subr.mxu0 0.0
    %399 = vmatpush1.msra.mxu0 0.0
    %400 = vmatprep.subr.mxu0 0.0
    %401 = vmatpush1.msra.mxu0 0.0
    %402 = vmatprep.subr.mxu0 0.0
    %403 = vmatpush1.msra.mxu0 0.0
    %404 = vmatprep.subr.mxu0 0.0
    %405 = vmatpush1.msra.mxu0 0.0
    %406 = vmatprep.subr.mxu0 0.0
    %407 = vmatpush1.msra.mxu0 0.0
    %408 = vmatprep.subr.mxu0 0.0
    %409 = vmatpush1.msra.mxu0 0.0
    %410 = vmatprep.subr.mxu0 0.0
    %411 = vmatpush1.msra.mxu0 0.0
    %412 = vmatprep.subr.mxu0 0.0
    %413 = vmatpush1.msra.mxu0 0.0
    %414 = vmatprep.subr.mxu0 0.0
    %415 = vmatpush1.msra.mxu0 0.0
    %416 = vmatprep.subr.mxu0 0.0
    %417 = vmatpush1.msra.mxu0 0.0
    %418 = vmatprep.subr.mxu0 0.0
    %419 = vmatpush1.msra.mxu0 0.0
    %420 = vmatprep.subr.mxu0 0.0
    %421 = vmatpush1.msra.mxu0 0.0
    %422 = vmatprep.subr.mxu0 0.0
    %423 = vmatpush1.msra.mxu0 0.0
    %424 = vmatprep.subr.mxu0 0.0
    %425 = vmatpush1.msra.mxu0 0.0
    %426 = vmatprep.subr.mxu0 0.0
    %427 = vmatpush1.msra.mxu0 0.0
    %428 = vmatprep.subr.mxu0 0.0
    %429 = vmatpush1.msra.mxu0 0.0
    %430 = vmatprep.subr.mxu0 0.0
    %431 = vmatpush1.msra.mxu0 0.0
    %432 = vmatprep.subr.mxu0 0.0
    %433 = vmatpush1.msra.mxu0 0.0
    %434 = vmatprep.subr.mxu0 0.0
    %435 = vmatpush1.msra.mxu0 0.0
    %436 = vmatprep.subr.mxu0 0.0
    %437 = vmatpush1.msra.mxu0 0.0
    %438 = vmatprep.subr.mxu0 0.0
    %439 = vmatpush1.msra.mxu0 0.0
    %440 = vmatprep.mubr.f32.mxu0 0.0
    %441 = vmatmul.mubr.f32.gmra.mrb[0].mxu0 %v303
    %v442 = vpop.f32.mrb[0].mxu0
    %v443 = vadd.f32 %v299, %v442
    %v444 = vpop.f32.mrb[0].mxu0
    %v445 = vadd.f32 %v299, %v444
    %446 = vdwg.mxu0
    %v447 = vmax.f32 %v372, 0.0
    %v448 = vmax.f32 %v374, 0.0
    %v449 = vmax.f32 %v443, 0.0
    %v450 = vmax.f32 %v445, 0.0
    %451 = vrot.lane.b32.xlu0 %v447, 17
    %v452 = vpop.permute.xlu0 %451
    %453 = vrot.lane.b32.xlu0 %v448, 17
    %v454 = vpop.permute.xlu0 %453
    %455 = vrot.lane.b32.xlu0 %v449, 17
    %v456 = vpop.permute.xlu0 %455
    %457 = vrot.lane.b32.xlu0 %v450, 17
    %v458 = vpop.permute.xlu0 %457
    %v459 = vsel %vm162, %v456, %v458
    %v460 = vsel %vm162, %v454, %v456
    %v461 = vsel %vm162, %v452, %v454
    %v462 = vsel %vm162, %v458, %v452
    %463 = vrot.lane.b32.xlu0 %v447, 16
    %v464 = vpop.permute.xlu0 %463
    %465 = vrot.lane.b32.xlu0 %v448, 16
    %v466 = vpop.permute.xlu0 %465
    %467 = vrot.lane.b32.xlu0 %v449, 16
    %v468 = vpop.permute.xlu0 %467
    %469 = vrot.lane.b32.xlu0 %v450, 16
    %v470 = vpop.permute.xlu0 %469
    %v471 = vsel %vm175, %v468, %v470
    %v472 = vsel %vm175, %v466, %v468
    %v473 = vsel %vm175, %v464, %v466
    %v474 = vsel %vm175, %v470, %v464
    %475 = vrot.lane.b32.xlu0 %v447, 15
    %v476 = vpop.permute.xlu0 %475
    %477 = vrot.lane.b32.xlu0 %v448, 15
    %v478 = vpop.permute.xlu0 %477
    %479 = vrot.lane.b32.xlu0 %v449, 15
    %v480 = vpop.permute.xlu0 %479
    %481 = vrot.lane.b32.xlu0 %v450, 15
    %v482 = vpop.permute.xlu0 %481
    %v483 = vsel %vm188, %v480, %v482
    %v484 = vsel %vm188, %v478, %v480
    %v485 = vsel %vm188, %v476, %v478
    %v486 = vsel %vm188, %v482, %v476
    %487 = vrot.lane.b32.xlu0 %v447, 1
    %v488 = vpop.permute.xlu0 %487
    %489 = vrot.lane.b32.xlu0 %v448, 1
    %v490 = vpop.permute.xlu0 %489
    %491 = vrot.lane.b32.xlu0 %v449, 1
    %v492 = vpop.permute.xlu0 %491
    %493 = vrot.lane.b32.xlu0 %v450, 1
    %v494 = vpop.permute.xlu0 %493
    %v495 = vsel %vm201, %v492, %v494
    %v496 = vsel %vm201, %v490, %v492
    %v497 = vsel %vm201, %v488, %v490
    %v498 = vsel %vm201, %v494, %v488
    %499 = vrot.lane.b32.xlu0 %v447, 127
    %v500 = vpop.permute.xlu0 %499
    %501 = vrot.lane.b32.xlu0 %v448, 127
    %v502 = vpop.permute.xlu0 %501
    %503 = vrot.lane.b32.xlu0 %v449, 127
    %v504 = vpop.permute.xlu0 %503
    %505 = vrot.lane.b32.xlu0 %v450, 127
    %v506 = vpop.permute.xlu0 %505
    %v507 = vsel %vm214, %v504, %v506
    %v508 = vsel %vm214, %v502, %v504
    %v509 = vsel %vm214, %v500, %v502
    %v510 = vsel %vm214, %v506, %v500
    %511 = vrot.lane.b32.xlu0 %v447, 113
    %v512 = vpop.permute.xlu0 %511
    %513 = vrot.lane.b32.xlu0 %v448, 113
    %v514 = vpop.permute.xlu0 %513
    %515 = vrot.lane.b32.xlu0 %v449, 113
    %v516 = vpop.permute.xlu0 %515
    %517 = vrot.lane.b32.xlu0 %v450, 113
    %v518 = vpop.permute.xlu0 %517
    %v519 = vsel %vm227, %v516, %v518
    %v520 = vsel %vm227, %v514, %v516
    %v521 = vsel %vm227, %v512, %v514
    %v522 = vsel %vm227, %v518, %v512
    %523 = vrot.lane.b32.xlu0 %v447, 112
    %v524 = vpop.permute.xlu0 %523
    %525 = vrot.lane.b32.xlu0 %v448, 112
    %v526 = vpop.permute.xlu0 %525
    %527 = vrot.lane.b32.xlu0 %v449, 112
    %v528 = vpop.permute.xlu0 %527
    %529 = vrot.lane.b32.xlu0 %v450, 112
    %v530 = vpop.permute.xlu0 %529
    %v531 = vsel %vm240, %v528, %v530
    %v532 = vsel %vm240, %v526, %v528
    %v533 = vsel %vm240, %v524, %v526
    %v534 = vsel %vm240, %v530, %v524
    %535 = vrot.lane.b32.xlu0 %v447, 111
    %v536 = vpop.permute.xlu0 %535
    %537 = vrot.lane.b32.xlu0 %v448, 111
    %v538 = vpop.permute.xlu0 %537
    %539 = vrot.lane.b32.xlu0 %v449, 111
    %v540 = vpop.permute.xlu0 %539
    %541 = vrot.lane.b32.xlu0 %v450, 111
    %v542 = vpop.permute.xlu0 %541
    %v543 = vsel %vm253, %v540, %v542
    %v544 = vsel %vm253, %v538, %v540
    %v545 = vsel %vm253, %v536, %v538
    %v546 = vsel %vm253, %v542, %v536
    %v547 = vmul.f32 %v462, %v75
    %v548 = vmul.f32 %v461, %v76
    %v549 = vmul.f32 %v460, %v77
    %v550 = vmul.f32 %v459, %v78
    %v551 = vmul.f32 %v474, %v79
    %v552 = vmul.f32 %v473, %v80
    %v553 = vmul.f32 %v472, %v81
    %v554 = vmul.f32 %v471, %v82
    %v555 = vmul.f32 %v486, %v83
    %v556 = vmul.f32 %v485, %v84
    %v557 = vmul.f32 %v484, %v85
    %v558 = vmul.f32 %v483, %v86
    %v559 = vmul.f32 %v498, %v87
    %v560 = vmul.f32 %v497, %v88
    %v561 = vmul.f32 %v496, %v89
    %v562 = vmul.f32 %v495, %v90
    %v563 = vmul.f32 %v447, %v91
    %v564 = vmul.f32 %v448, %v92
    %v565 = vmul.f32 %v449, %v93
    %v566 = vmul.f32 %v450, %v94
    %v567 = vmul.f32 %v509, %v95
    %v568 = vmul.f32 %v508, %v96
    %v569 = vmul.f32 %v507, %v97
    %v570 = vmul.f32 %v510, %v98
    %v571 = vmul.f32 %v521, %v99
    %v572 = vmul.f32 %v520, %v100
    %v573 = vmul.f32 %v519, %v101
    %v574 = vmul.f32 %v522, %v102
    %v575 = vmul.f32 %v533, %v103
    %v576 = vmul.f32 %v532, %v104
    %v577 = vmul.f32 %v531, %v105
    %v578 = vmul.f32 %v534, %v106
    %v579 = vmul.f32 %v545, %v107
    %v580 = vmul.f32 %v544, %v108
    %v581 = vmul.f32 %v543, %v109
    %v582 = vmul.f32 %v546, %v110
    %v583 = vld [vmem:[%s6] sm:$0xf]
    %v584 = vld [vmem:[%s7] sm:$0xf]
    %586 = vset.pattern.permute.xlu0 0
    %587 = vperm.xlu0 %586, %v584
    %v588 = vpop.permute.xlu0 %587
    %v591 = vsel %vm301, %v583, 0
    %593 = vmatprep.subr.mxu0 %v548
    %594 = vmatpush1.msra.mxu0 %v547
    %595 = vmatprep.subr.mxu0 %v552
    %596 = vmatpush1.msra.mxu0 %v551
    %597 = vmatprep.subr.mxu0 %v556
    %598 = vmatpush1.msra.mxu0 %v555
    %599 = vmatprep.subr.mxu0 %v560
    %600 = vmatpush1.msra.mxu0 %v559
    %601 = vmatprep.subr.mxu0 %v564
    %602 = vmatpush1.msra.mxu0 %v563
    %603 = vmatprep.subr.mxu0 %v568
    %604 = vmatpush1.msra.mxu0 %v567
    %605 = vmatprep.subr.mxu0 %v572
    %606 = vmatpush1.msra.mxu0 %v571
    %607 = vmatprep.subr.mxu0 %v576
    %608 = vmatpush1.msra.mxu0 %v575
    %609 = vmatprep.subr.mxu0 %v580
    %610 = vmatpush1.msra.mxu0 %v579
    %611 = vmatprep.subr.mxu0 0.0
    %612 = vmatpush1.msra.mxu0 0.0
    %613 = vmatprep.subr.mxu0 0.0
    %614 = vmatpush1.msra.mxu0 0.0
    %615 = vmatprep.subr.mxu0 0.0
    %616 = vmatpush1.msra.mxu0 0.0
    %617 = vmatprep.subr.mxu0 0.0
    %618 = vmatpush1.msra.mxu0 0.0
    %619 = vmatprep.subr.mxu0 0.0
    %620 = vmatpush1.msra.mxu0 0.0
    %621 = vmatprep.subr.mxu0 0.0
    %622 = vmatpush1.msra.mxu0 0.0
    %623 = vmatprep.subr.mxu0 0.0
    %624 = vmatpush1.msra.mxu0 0.0
    %625 = vmatprep.subr.mxu0 0.0
    %626 = vmatpush1.msra.mxu0 0.0
    %627 = vmatprep.subr.mxu0 0.0
    %628 = vmatpush1.msra.mxu0 0.0
    %629 = vmatprep.subr.mxu0 0.0
    %630 = vmatpush1.msra.mxu0 0.0
    %631 = vmatprep.subr.mxu0 0.0
    %632 = vmatpush1.msra.mxu0 0.0
    %633 = vmatprep.subr.mxu0 0.0
    %634 = vmatpush1.msra.mxu0 0.0
    %635 = vmatprep.subr.mxu0 0.0
    %636 = vmatpush1.msra.mxu0 0.0
    %637 = vmatprep.subr.mxu0 0.0
    %638 = vmatpush1.msra.mxu0 0.0
    %639 = vmatprep.subr.mxu0 0.0
    %640 = vmatpush1.msra.mxu0 0.0
    %641 = vmatprep.subr.mxu0 0.0
    %642 = vmatpush1.msra.mxu0 0.0
    %643 = vmatprep.subr.mxu0 0.0
    %644 = vmatpush1.msra.mxu0 0.0
    %645 = vmatprep.subr.mxu0 0.0
    %646 = vmatpush1.msra.mxu0 0.0
    %647 = vmatprep.subr.mxu0 0.0
    %648 = vmatpush1.msra.mxu0 0.0
    %649 = vmatprep.subr.mxu0 0.0
    %650 = vmatpush1.msra.mxu0 0.0
    %651 = vmatprep.subr.mxu0 0.0
    %652 = vmatpush1.msra.mxu0 0.0
    %653 = vmatprep.subr.mxu0 0.0
    %654 = vmatpush1.msra.mxu0 0.0
    %655 = vmatprep.subr.mxu0 0.0
    %656 = vmatpush1.msra.mxu0 0.0
    %657 = vmatprep.mubr.f32.mxu0 0.0
    %658 = vmatmul.mubr.f32.gmra.mrb[0].mxu0 %v591
    %v659 = vpop.f32.mrb[0].mxu0
    %v660 = vadd.f32 %v588, %v659
    %v661 = vpop.f32.mrb[0].mxu0
    %v662 = vadd.f32 %v588, %v661
    %663 = vdwg.mxu0
    %664 = vmatprep.subr.mxu0 %v550
    %665 = vmatpush1.msra.mxu0 %v549
    %666 = vmatprep.subr.mxu0 %v554
    %667 = vmatpush1.msra.mxu0 %v553
    %668 = vmatprep.subr.mxu0 %v558
    %669 = vmatpush1.msra.mxu0 %v557
    %670 = vmatprep.subr.mxu0 %v562
    %671 = vmatpush1.msra.mxu0 %v561
    %672 = vmatprep.subr.mxu0 %v566
    %673 = vmatpush1.msra.mxu0 %v565
    %674 = vmatprep.subr.mxu0 %v570
    %675 = vmatpush1.msra.mxu0 %v569
    %676 = vmatprep.subr.mxu0 %v574
    %677 = vmatpush1.msra.mxu0 %v573
    %678 = vmatprep.subr.mxu0 %v578
    %679 = vmatpush1.msra.mxu0 %v577
    %680 = vmatprep.subr.mxu0 %v582
    %681 = vmatpush1.msra.mxu0 %v581
    %682 = vmatprep.subr.mxu0 0.0
    %683 = vmatpush1.msra.mxu0 0.0
    %684 = vmatprep.subr.mxu0 0.0
    %685 = vmatpush1.msra.mxu0 0.0
    %686 = vmatprep.subr.mxu0 0.0
    %687 = vmatpush1.msra.mxu0 0.0
    %688 = vmatprep.subr.mxu0 0.0
    %689 = vmatpush1.msra.mxu0 0.0
    %690 = vmatprep.subr.mxu0 0.0
    %691 = vmatpush1.msra.mxu0 0.0
    %692 = vmatprep.subr.mxu0 0.0
    %693 = vmatpush1.msra.mxu0 0.0
    %694 = vmatprep.subr.mxu0 0.0
    %695 = vmatpush1.msra.mxu0 0.0
    %696 = vmatprep.subr.mxu0 0.0
    %697 = vmatpush1.msra.mxu0 0.0
    %698 = vmatprep.subr.mxu0 0.0
    %699 = vmatpush1.msra.mxu0 0.0
    %700 = vmatprep.subr.mxu0 0.0
    %701 = vmatpush1.msra.mxu0 0.0
    %702 = vmatprep.subr.mxu0 0.0
    %703 = vmatpush1.msra.mxu0 0.0
    %704 = vmatprep.subr.mxu0 0.0
    %705 = vmatpush1.msra.mxu0 0.0
    %706 = vmatprep.subr.mxu0 0.0
    %707 = vmatpush1.msra.mxu0 0.0
    %708 = vmatprep.subr.mxu0 0.0
    %709 = vmatpush1.msra.mxu0 0.0
    %710 = vmatprep.subr.mxu0 0.0
    %711 = vmatpush1.msra.mxu0 0.0
    %712 = vmatprep.subr.mxu0 0.0
    %713 = vmatpush1.msra.mxu0 0.0
    %714 = vmatprep.subr.mxu0 0.0
    %715 = vmatpush1.msra.mxu0 0.0
    %716 = vmatprep.subr.mxu0 0.0
    %717 = vmatpush1.msra.mxu0 0.0
    %718 = vmatprep.subr.mxu0 0.0
    %719 = vmatpush1.msra.mxu0 0.0
    %720 = vmatprep.subr.mxu0 0.0
    %721 = vmatpush1.msra.mxu0 0.0
    %722 = vmatprep.subr.mxu0 0.0
    %723 = vmatpush1.msra.mxu0 0.0
    %724 = vmatprep.subr.mxu0 0.0
    %725 = vmatpush1.msra.mxu0 0.0
    %726 = vmatprep.subr.mxu0 0.0
    %727 = vmatpush1.msra.mxu0 0.0
    %728 = vmatprep.mubr.f32.mxu0 0.0
    %729 = vmatmul.mubr.f32.gmra.mrb[0].mxu0 %v591
    %v730 = vpop.f32.mrb[0].mxu0
    %v731 = vadd.f32 %v588, %v730
    %v732 = vpop.f32.mrb[0].mxu0
    %v733 = vadd.f32 %v588, %v732
    %734 = vdwg.mxu0
    %v735 = vmax.f32 %v660, 0.0
    %v736 = vmax.f32 %v662, 0.0
    %v737 = vmax.f32 %v731, 0.0
    %v738 = vmax.f32 %v733, 0.0
    %739 = vrot.lane.b32.xlu0 %v735, 17
    %v740 = vpop.permute.xlu0 %739
    %741 = vrot.lane.b32.xlu0 %v736, 17
    %v742 = vpop.permute.xlu0 %741
    %743 = vrot.lane.b32.xlu0 %v737, 17
    %v744 = vpop.permute.xlu0 %743
    %745 = vrot.lane.b32.xlu0 %v738, 17
    %v746 = vpop.permute.xlu0 %745
    %v747 = vsel %vm162, %v744, %v746
    %v748 = vsel %vm162, %v742, %v744
    %v749 = vsel %vm162, %v740, %v742
    %v750 = vsel %vm162, %v746, %v740
    %751 = vrot.lane.b32.xlu0 %v735, 16
    %v752 = vpop.permute.xlu0 %751
    %753 = vrot.lane.b32.xlu0 %v736, 16
    %v754 = vpop.permute.xlu0 %753
    %755 = vrot.lane.b32.xlu0 %v737, 16
    %v756 = vpop.permute.xlu0 %755
    %757 = vrot.lane.b32.xlu0 %v738, 16
    %v758 = vpop.permute.xlu0 %757
    %v759 = vsel %vm175, %v756, %v758
    %v760 = vsel %vm175, %v754, %v756
    %v761 = vsel %vm175, %v752, %v754
    %v762 = vsel %vm175, %v758, %v752
    %763 = vrot.lane.b32.xlu0 %v735, 15
    %v764 = vpop.permute.xlu0 %763
    %765 = vrot.lane.b32.xlu0 %v736, 15
    %v766 = vpop.permute.xlu0 %765
    %767 = vrot.lane.b32.xlu0 %v737, 15
    %v768 = vpop.permute.xlu0 %767
    %769 = vrot.lane.b32.xlu0 %v738, 15
    %v770 = vpop.permute.xlu0 %769
    %v771 = vsel %vm188, %v768, %v770
    %v772 = vsel %vm188, %v766, %v768
    %v773 = vsel %vm188, %v764, %v766
    %v774 = vsel %vm188, %v770, %v764
    %775 = vrot.lane.b32.xlu0 %v735, 1
    %v776 = vpop.permute.xlu0 %775
    %777 = vrot.lane.b32.xlu0 %v736, 1
    %v778 = vpop.permute.xlu0 %777
    %779 = vrot.lane.b32.xlu0 %v737, 1
    %v780 = vpop.permute.xlu0 %779
    %781 = vrot.lane.b32.xlu0 %v738, 1
    %v782 = vpop.permute.xlu0 %781
    %v783 = vsel %vm201, %v780, %v782
    %v784 = vsel %vm201, %v778, %v780
    %v785 = vsel %vm201, %v776, %v778
    %v786 = vsel %vm201, %v782, %v776
    %787 = vrot.lane.b32.xlu0 %v735, 127
    %v788 = vpop.permute.xlu0 %787
    %789 = vrot.lane.b32.xlu0 %v736, 127
    %v790 = vpop.permute.xlu0 %789
    %791 = vrot.lane.b32.xlu0 %v737, 127
    %v792 = vpop.permute.xlu0 %791
    %793 = vrot.lane.b32.xlu0 %v738, 127
    %v794 = vpop.permute.xlu0 %793
    %v795 = vsel %vm214, %v792, %v794
    %v796 = vsel %vm214, %v790, %v792
    %v797 = vsel %vm214, %v788, %v790
    %v798 = vsel %vm214, %v794, %v788
    %799 = vrot.lane.b32.xlu0 %v735, 113
    %v800 = vpop.permute.xlu0 %799
    %801 = vrot.lane.b32.xlu0 %v736, 113
    %v802 = vpop.permute.xlu0 %801
    %803 = vrot.lane.b32.xlu0 %v737, 113
    %v804 = vpop.permute.xlu0 %803
    %805 = vrot.lane.b32.xlu0 %v738, 113
    %v806 = vpop.permute.xlu0 %805
    %v807 = vsel %vm227, %v804, %v806
    %v808 = vsel %vm227, %v802, %v804
    %v809 = vsel %vm227, %v800, %v802
    %v810 = vsel %vm227, %v806, %v800
    %811 = vrot.lane.b32.xlu0 %v735, 112
    %v812 = vpop.permute.xlu0 %811
    %813 = vrot.lane.b32.xlu0 %v736, 112
    %v814 = vpop.permute.xlu0 %813
    %815 = vrot.lane.b32.xlu0 %v737, 112
    %v816 = vpop.permute.xlu0 %815
    %817 = vrot.lane.b32.xlu0 %v738, 112
    %v818 = vpop.permute.xlu0 %817
    %v819 = vsel %vm240, %v816, %v818
    %v820 = vsel %vm240, %v814, %v816
    %v821 = vsel %vm240, %v812, %v814
    %v822 = vsel %vm240, %v818, %v812
    %823 = vrot.lane.b32.xlu0 %v735, 111
    %v824 = vpop.permute.xlu0 %823
    %825 = vrot.lane.b32.xlu0 %v736, 111
    %v826 = vpop.permute.xlu0 %825
    %827 = vrot.lane.b32.xlu0 %v737, 111
    %v828 = vpop.permute.xlu0 %827
    %829 = vrot.lane.b32.xlu0 %v738, 111
    %v830 = vpop.permute.xlu0 %829
    %v831 = vsel %vm253, %v828, %v830
    %v832 = vsel %vm253, %v826, %v828
    %v833 = vsel %vm253, %v824, %v826
    %v834 = vsel %vm253, %v830, %v824
    %v839 = vrot.slane %v762, 4
    %v840 = vrot.slane %v761, 4
    %v841 = vrot.slane %v760, 4
    %v842 = vrot.slane %v759, 4
    %v851 = vrot.slane %v786, 4
    %v852 = vrot.slane %v785, 4
    %v853 = vrot.slane %v784, 4
    %v854 = vrot.slane %v783, 4
    %v863 = vrot.slane %v797, 4
    %v864 = vrot.slane %v796, 4
    %v865 = vrot.slane %v795, 4
    %v866 = vrot.slane %v798, 4
    %v875 = vrot.slane %v821, 4
    %v876 = vrot.slane %v820, 4
    %v877 = vrot.slane %v819, 4
    %v878 = vrot.slane %v822, 4
    %v883 = vsel %vm147, %v750, %v839
    %v884 = vsel %vm147, %v749, %v840
    %v885 = vsel %vm147, %v748, %v841
    %v886 = vsel %vm147, %v747, %v842
    %v887 = vsel %vm147, %v774, %v851
    %v888 = vsel %vm147, %v773, %v852
    %v889 = vsel %vm147, %v772, %v853
    %v890 = vsel %vm147, %v771, %v854
    %v891 = vsel %vm147, %v735, %v863
    %v892 = vsel %vm147, %v736, %v864
    %v893 = vsel %vm147, %v737, %v865
    %v894 = vsel %vm147, %v738, %v866
    %v895 = vsel %vm147, %v809, %v875
    %v896 = vsel %vm147, %v808, %v876
    %v897 = vsel %vm147, %v807, %v877
    %v898 = vsel %vm147, %v810, %v878
    %v899 = vmul.f32 %v883, %v111
    %v900 = vmul.f32 %v884, %v112
    %v901 = vmul.f32 %v885, %v113
    %v902 = vmul.f32 %v886, %v114
    %v903 = vmul.f32 %v887, %v115
    %v904 = vmul.f32 %v888, %v116
    %v905 = vmul.f32 %v889, %v117
    %v906 = vmul.f32 %v890, %v118
    %v907 = vmul.f32 %v891, %v119
    %v908 = vmul.f32 %v892, %v120
    %v909 = vmul.f32 %v893, %v121
    %v910 = vmul.f32 %v894, %v122
    %v911 = vmul.f32 %v895, %v123
    %v912 = vmul.f32 %v896, %v124
    %v913 = vmul.f32 %v897, %v125
    %v914 = vmul.f32 %v898, %v126
    %v915 = vmul.f32 %v833, %v127
    %v916 = vmul.f32 %v832, %v128
    %v917 = vmul.f32 %v831, %v129
    %v918 = vmul.f32 %v834, %v130
    %v919 = vld [vmem:[%s8] sm:$0xf]
    %v920 = vld [vmem:[%s9] sm:$0xf]
    %922 = vset.pattern.permute.xlu0 0
    %923 = vperm.xlu0 %922, %v920
    %v924 = vpop.permute.xlu0 %923
    %vm926 = vcmask 293888
    %v928 = vsel %vm926, %v919, 0
    %v931 = vsel %vm147, %v915, 0
    %v934 = vsel %vm147, %v916, 0
    %v937 = vsel %vm147, %v917, 0
    %v940 = vsel %vm147, %v918, 0
    %942 = vmatprep.subr.mxu0 %v900
    %943 = vmatpush1.msra.mxu0 %v899
    %944 = vmatprep.subr.mxu0 %v904
    %945 = vmatpush1.msra.mxu0 %v903
    %946 = vmatprep.subr.mxu0 %v908
    %947 = vmatpush1.msra.mxu0 %v907
    %948 = vmatprep.subr.mxu0 %v912
    %949 = vmatpush1.msra.mxu0 %v911
    %950 = vmatprep.subr.mxu0 %v934
    %951 = vmatpush1.msra.mxu0 %v931
    %952 = vmatprep.subr.mxu0 0.0
    %953 = vmatpush1.msra.mxu0 0.0
    %954 = vmatprep.subr.mxu0 0.0
    %955 = vmatpush1.msra.mxu0 0.0
    %956 = vmatprep.subr.mxu0 0.0
    %957 = vmatpush1.msra.mxu0 0.0
    %958 = vmatprep.subr.mxu0 0.0
    %959 = vmatpush1.msra.mxu0 0.0
    %960 = vmatprep.subr.mxu0 0.0
    %961 = vmatpush1.msra.mxu0 0.0
    %962 = vmatprep.subr.mxu0 0.0
    %963 = vmatpush1.msra.mxu0 0.0
    %964 = vmatprep.subr.mxu0 0.0
    %965 = vmatpush1.msra.mxu0 0.0
    %966 = vmatprep.subr.mxu0 0.0
    %967 = vmatpush1.msra.mxu0 0.0
    %968 = vmatprep.subr.mxu0 0.0
    %969 = vmatpush1.msra.mxu0 0.0
    %970 = vmatprep.subr.mxu0 0.0
    %971 = vmatpush1.msra.mxu0 0.0
    %972 = vmatprep.subr.mxu0 0.0
    %973 = vmatpush1.msra.mxu0 0.0
    %974 = vmatprep.subr.mxu0 0.0
    %975 = vmatpush1.msra.mxu0 0.0
    %976 = vmatprep.subr.mxu0 0.0
    %977 = vmatpush1.msra.mxu0 0.0
    %978 = vmatprep.subr.mxu0 0.0
    %979 = vmatpush1.msra.mxu0 0.0
    %980 = vmatprep.subr.mxu0 0.0
    %981 = vmatpush1.msra.mxu0 0.0
    %982 = vmatprep.subr.mxu0 0.0
    %983 = vmatpush1.msra.mxu0 0.0
    %984 = vmatprep.subr.mxu0 0.0
    %985 = vmatpush1.msra.mxu0 0.0
    %986 = vmatprep.subr.mxu0 0.0
    %987 = vmatpush1.msra.mxu0 0.0
    %988 = vmatprep.subr.mxu0 0.0
    %989 = vmatpush1.msra.mxu0 0.0
    %990 = vmatprep.subr.mxu0 0.0
    %991 = vmatpush1.msra.mxu0 0.0
    %992 = vmatprep.subr.mxu0 0.0
    %993 = vmatpush1.msra.mxu0 0.0
    %994 = vmatprep.subr.mxu0 0.0
    %995 = vmatpush1.msra.mxu0 0.0
    %996 = vmatprep.subr.mxu0 0.0
    %997 = vmatpush1.msra.mxu0 0.0
    %998 = vmatprep.subr.mxu0 0.0
    %999 = vmatpush1.msra.mxu0 0.0
    %1000 = vmatprep.subr.mxu0 0.0
    %1001 = vmatpush1.msra.mxu0 0.0
    %1002 = vmatprep.subr.mxu0 0.0
    %1003 = vmatpush1.msra.mxu0 0.0
    %1004 = vmatprep.subr.mxu0 0.0
    %1005 = vmatpush1.msra.mxu0 0.0
    %1006 = vmatprep.mubr.f32.mxu0 0.0
    %1007 = vmatmul.mubr.f32.gmra.mrb[0].mxu0 %v928
    %v1008 = vpop.f32.mrb[0].mxu0
    %v1009 = vadd.f32 %v924, %v1008
    %v1010 = vpop.f32.mrb[0].mxu0
    %v1011 = vadd.f32 %v924, %v1010
    %1012 = vdwg.mxu0
    %1013 = vmatprep.subr.mxu0 %v902
    %1014 = vmatpush1.msra.mxu0 %v901
    %1015 = vmatprep.subr.mxu0 %v906
    %1016 = vmatpush1.msra.mxu0 %v905
    %1017 = vmatprep.subr.mxu0 %v910
    %1018 = vmatpush1.msra.mxu0 %v909
    %1019 = vmatprep.subr.mxu0 %v914
    %1020 = vmatpush1.msra.mxu0 %v913
    %1021 = vmatprep.subr.mxu0 %v940
    %1022 = vmatpush1.msra.mxu0 %v937
    %1023 = vmatprep.subr.mxu0 0.0
    %1024 = vmatpush1.msra.mxu0 0.0
    %1025 = vmatprep.subr.mxu0 0.0
    %1026 = vmatpush1.msra.mxu0 0.0
    %1027 = vmatprep.subr.mxu0 0.0
    %1028 = vmatpush1.msra.mxu0 0.0
    %1029 = vmatprep.subr.mxu0 0.0
    %1030 = vmatpush1.msra.mxu0 0.0
    %1031 = vmatprep.subr.mxu0 0.0
    %1032 = vmatpush1.msra.mxu0 0.0
    %1033 = vmatprep.subr.mxu0 0.0
    %1034 = vmatpush1.msra.mxu0 0.0
    %1035 = vmatprep.subr.mxu0 0.0
    %1036 = vmatpush1.msra.mxu0 0.0
    %1037 = vmatprep.subr.mxu0 0.0
    %1038 = vmatpush1.msra.mxu0 0.0
    %1039 = vmatprep.subr.mxu0 0.0
    %1040 = vmatpush1.msra.mxu0 0.0
    %1041 = vmatprep.subr.mxu0 0.0
    %1042 = vmatpush1.msra.mxu0 0.0
    %1043 = vmatprep.subr.mxu0 0.0
    %1044 = vmatpush1.msra.mxu0 0.0
    %1045 = vmatprep.subr.mxu0 0.0
    %1046 = vmatpush1.msra.mxu0 0.0
    %1047 = vmatprep.subr.mxu0 0.0
    %1048 = vmatpush1.msra.mxu0 0.0
    %1049 = vmatprep.subr.mxu0 0.0
    %1050 = vmatpush1.msra.mxu0 0.0
    %1051 = vmatprep.subr.mxu0 0.0
    %1052 = vmatpush1.msra.mxu0 0.0
    %1053 = vmatprep.subr.mxu0 0.0
    %1054 = vmatpush1.msra.mxu0 0.0
    %1055 = vmatprep.subr.mxu0 0.0
    %1056 = vmatpush1.msra.mxu0 0.0
    %1057 = vmatprep.subr.mxu0 0.0
    %1058 = vmatpush1.msra.mxu0 0.0
    %1059 = vmatprep.subr.mxu0 0.0
    %1060 = vmatpush1.msra.mxu0 0.0
    %1061 = vmatprep.subr.mxu0 0.0
    %1062 = vmatpush1.msra.mxu0 0.0
    %1063 = vmatprep.subr.mxu0 0.0
    %1064 = vmatpush1.msra.mxu0 0.0
    %1065 = vmatprep.subr.mxu0 0.0
    %1066 = vmatpush1.msra.mxu0 0.0
    %1067 = vmatprep.subr.mxu0 0.0
    %1068 = vmatpush1.msra.mxu0 0.0
    %1069 = vmatprep.subr.mxu0 0.0
    %1070 = vmatpush1.msra.mxu0 0.0
    %1071 = vmatprep.subr.mxu0 0.0
    %1072 = vmatpush1.msra.mxu0 0.0
    %1073 = vmatprep.subr.mxu0 0.0
    %1074 = vmatpush1.msra.mxu0 0.0
    %1075 = vmatprep.subr.mxu0 0.0
    %1076 = vmatpush1.msra.mxu0 0.0
    %1077 = vmatprep.mubr.f32.mxu0 0.0
    %1078 = vmatmul.mubr.f32.gmra.mrb[0].mxu0 %v928
    %v1079 = vpop.f32.mrb[0].mxu0
    %v1080 = vadd.f32 %v924, %v1079
    %v1081 = vpop.f32.mrb[0].mxu0
    %v1082 = vadd.f32 %v924, %v1081
    %1083 = vdwg.mxu0
    %v1088 = vcombine.low %v1009, %v1011
    %v1089 = vcombine.low %v1080, %v1082
    %1092 = vst [vmem:[#allocation8] sm:$0xff] %v1088
    %1093 = vst [vmem:[#allocation8 + $0x8] sm:$0xff] %v1089
    // Predicated region
    $region54: #{tpu_custom_call.1} parent=1 // pred_check
      _
    $region55: #{tpu_custom_call.1} parent=1 // pred_check_branch
      %1095 = sbr.rel (0) target = $region57
    $region56: #{tpu_custom_call.1} parent=1 // pred_region
      %s1097 = ssub.s32 256, 256
      %1098 = vsyncadd [#allocation4], %s1097
      %s1100 = sshll.u32 [#allocation8], 4
      %s1101 = int_to_ptr.vmem [resolvable:$true] %s1100
      %1103 = dma.vmem_to_hbm [thread:$0]  %s1101, 256, %s10, [#allocation4]
    $region57: #{tpu_custom_call.1} parent=1 // pred_fallthru
      _
    // Predicated region
    $region58: #{tpu_custom_call.1} parent=1 // pred_check
      _
    $region59: #{tpu_custom_call.1} parent=1 // pred_check_branch
      %1105 = sbr.rel (0) target = $region61
    $region60: #{tpu_custom_call.1} parent=1 // pred_region
      %1106 = dma.done [#allocation4], 256
    $region61: #{tpu_custom_call.1} parent=1 // pred_fallthru
      _
    %1107 = vsyncpa [#allocation3], 1
    %1108 = vsyncpa [#allocation6], 1
    %1109 = vsyncpa [#allocation4], 1

</llo_original>
